<compile_context>
chip_gen: v7x
topology: tpu7x:2x2x1
jax: 0.10.0
libtpu: 0.0.40
codegen_flags: <defaults>
</compile_context>

<pallas_src>
import functools

import jax
import jax.numpy as jnp
from jax import lax
from jax.experimental import pallas as pl
from jax.experimental.pallas import tpu as pltpu


def _round_up(v, m):
    return ((v + m - 1) // m) * m


def _poly_layer_kernel(x_ref, w_ref, c_ref, o_ref, *, degree):
    # x block: (TR, G*C) lane-dense; upcast in-kernel (keeps HBM traffic at the input dtype).
    x = x_ref[...].astype(jnp.float32)
    xp = x
    # Accumulate `degree` small dots into one f32 acc (no lane-axis concat of powers).
    acc = jnp.dot(xp, w_ref[0], precision=lax.Precision.HIGHEST,
                  preferred_element_type=jnp.float32)
    for i in range(1, degree):
        xp = xp * x                                  # full-lane VPU power update
        acc = acc + jnp.dot(xp, w_ref[i], precision=lax.Precision.HIGHEST,
                            preferred_element_type=jnp.float32)
    o_ref[...] = acc + c_ref[...]                    # bias broadcast over the packed lane axis


def polynomial_layer(x, A, c, *, block_rows=8192):
    """x: (B, centers), A: (degree, centers, states-1), c: (1, states-1) -> (B, states) f32."""
    B, C = x.shape
    D, C2, P = A.shape
    assert C2 == C, (C2, C)
    S = P + 1  # states (extra leading zero column)

    A = jnp.asarray(A).astype(jnp.float32)
    c = jnp.asarray(c).reshape(1, P).astype(jnp.float32)

    # Lane-packing factor: G batch rows per 128-lane row (metadata-only reshape for row-major x).
    G = (128 // C) if (C <= 128 and 128 % C == 0) else 1

    Bp = _round_up(B, G)
    x_in = x if Bp == B else jnp.pad(x, ((0, Bp - B), (0, 0)))   # only copies for ragged B
    R = Bp // G
    x2 = x_in.reshape(R, G * C)                                   # free (contiguous) reshape

    # Host-side weight prep (done once):
    #   zero-pad a leading state column, then replicate block-diagonally over the G lane groups.
    A_pad = jnp.concatenate([jnp.zeros((D, C, 1), jnp.float32), A], axis=2)       # (D, C, S)
    eye = jnp.eye(G, dtype=jnp.float32)
    W = jnp.einsum("gh,dcs->dgchs", eye, A_pad).reshape(D, G * C, G * S)          # (D, G*C, G*S)
    c_row = jnp.concatenate([jnp.zeros((1, 1), jnp.float32), c], axis=1)          # (1, S)
    c_pack = jnp.tile(c_row, (1, G))                                              # (1, G*S)

    # Tile selection: large (amortize per-step overhead; ~4 MiB useful input at 8192 rows),
    # but split so the grid has >=2 steps (v7x megacore) whenever the batch is big enough.
    if R <= 8:
        TR = R
    else:
        TR = min(block_rows, _round_up(pl.cdiv(R, 2), 8))
    grid = (pl.cdiv(R, TR),)

    # Roofline note: arithmetic intensity ~ 2*D*S/bytes_per_elem ~= 3 FLOP/byte -> memory bound
    # on every TPU generation; the estimate below reflects pure streaming traffic.
    cost = pl.CostEstimate(
        flops=2 * Bp * D * C * S,
        transcendentals=0,
        bytes_accessed=(x2.size * x2.dtype.itemsize        # streamed input (original dtype)
                        + R * G * S * 4                    # packed output
                        + W.size * 4 + c_pack.size * 4),   # resident weights/bias
    )

    kernel = functools.partial(_poly_layer_kernel, degree=D)
    out_packed = pl.pallas_call(
        kernel,
        out_shape=jax.ShapeDtypeStruct((R, G * S), jnp.float32),
        grid=grid,
        in_specs=[
            pl.BlockSpec((TR, G * C), lambda b: (b, 0)),          # streamed / pipelined, lane-dense
            pl.BlockSpec((D, G * C, G * S), lambda b: (0, 0, 0)),  # weights resident in VMEM
            pl.BlockSpec((1, G * S), lambda b: (0, 0)),            # bias resident in VMEM
        ],
        out_specs=pl.BlockSpec((TR, G * S), lambda b: (b, 0)),
        compiler_params=pltpu.CompilerParams(
            dimension_semantics=("parallel",),        # megacore sharding on v7x
            vmem_limit_bytes=32 * 1024 * 1024,        # covers v5e's 16 MiB scoped default
        ),
        cost_estimate=cost,
    )(x2, W, c_pack)

    out = out_packed.reshape(Bp, S)                   # free (contiguous) unpack of lane groups
    return out if Bp == B else out[:B]


def polynomial_layer_ref(x, A, c):
    """Pure-JAX reference mirroring the PyTorch forward."""
    D = A.shape[0]
    xf = x.astype(jnp.float32)
    acc = sum(
        jnp.einsum("bc,cp->bp", xf ** (i + 1), A[i].astype(jnp.float32),
                   precision=lax.Precision.HIGHEST)
        for i in range(D)
    ) + jnp.asarray(c, jnp.float32).reshape(1, -1)
    return jnp.concatenate([jnp.zeros((x.shape[0], 1), jnp.float32), acc], axis=1)


if __name__ == "__main__":
    centers, states, degree = 16, 3, 2

    key = jax.random.PRNGKey(0)
    kx1, kx2, ka, kc = jax.random.split(key, 4)

    # NOTE: the PyTorch module initializes a and c to zeros (trivial output);
    # use small deterministic random values instead so the test is non-trivial.
    A = 0.1 * jax.random.normal(ka, (degree, centers, states - 1), dtype=jnp.float32)
    c = 0.1 * jax.random.normal(kc, (1, states - 1), dtype=jnp.float32)

    # Test 1: small f32 batch, single block.
    B1 = 64
    x1 = jax.random.normal(kx1, (B1, centers), dtype=jnp.float32)
    out1 = jax.block_until_ready(polynomial_layer(x1, A, c))
    exp1 = polynomial_layer_ref(x1, A, c)
    assert out1.shape == (B1, states), out1.shape
    assert bool(jnp.allclose(out1[:, 0], 0.0)), "first column must be zeros"
    assert bool(jnp.allclose(out1, exp1, atol=1e-5, rtol=1e-5)), "mismatch vs reference (f32)"

    # Test 2: multi-step pipelined grid with a partial final block, batch not a multiple of the
    # lane-packing factor (exercises host-side pad+slice), and a bf16 input (in-kernel upcast).
    B2 = 70
    x2 = jax.random.normal(kx2, (B2, centers), dtype=jnp.bfloat16)
    out2 = jax.block_until_ready(polynomial_layer(x2, A, c, block_rows=8))
    exp2 = polynomial_layer_ref(x2, A, c)
    assert out2.shape == (B2, states), out2.shape
    assert bool(jnp.allclose(out2[:, 0], 0.0)), "first column must be zeros"
    assert bool(jnp.allclose(out2, exp2, atol=1e-4, rtol=1e-4)), "mismatch vs reference (bf16)"

    print("KERNEL_OK")
</pallas_src>

<mosaic_0001>
module attributes {stable_mosaic.version = 11 : i64} {
  func.func @_poly_layer_kernel(%arg0: i32, %arg1: memref<8x128xf32, #tpu.memory_space<vmem>>, %arg2: memref<2x128x24xf32, #tpu.memory_space<vmem>>, %arg3: memref<1x24xf32, #tpu.memory_space<vmem>>, %arg4: memref<8x24xf32, #tpu.memory_space<vmem>>) attributes {dimension_semantics = [#tpu.dimension_semantics<parallel>], iteration_bounds = array<i64: 1>, scalar_prefetch = 0 : i64, scratch_operands = 0 : i64, tpu.core_type = #tpu.core_type<tc>, window_params = [{transform_indices = @transform_0, window_bounds = array<i64: 8, 128>}, {pipeline_mode = #tpu.pipeline_mode<synchronous>, transform_indices = @transform_1, window_bounds = array<i64: 2, 128, 24>}, {pipeline_mode = #tpu.pipeline_mode<synchronous>, transform_indices = @transform_2, window_bounds = array<i64: 1, 24>}, {transform_indices = @transform_3, window_bounds = array<i64: 8, 24>}]} {
    %c0 = arith.constant 0 : index
    %c0_0 = arith.constant 0 : index
    %0 = vector.load %arg1[%c0, %c0_0] : memref<8x128xf32, #tpu.memory_space<vmem>>, vector<8x128xf32>
    %c0_1 = arith.constant 0 : index
    %c0_2 = arith.constant 0 : index
    %c0_3 = arith.constant 0 : index
    %1 = vector.load %arg2[%c0_1, %c0_2, %c0_3] : memref<2x128x24xf32, #tpu.memory_space<vmem>>, vector<1x128x24xf32>
    %2 = vector.shape_cast %1 : vector<1x128x24xf32> to vector<128x24xf32>
    %cst = arith.constant dense<0.000000e+00> : vector<8x24xf32>
    %3 = tpu.matmul %0, %2, %cst {dimension_numbers = #tpu.dot_dimension_numbers<[1], [0], [0], [1], [0, 0, 1, 1], [], []>, precision = #tpu.contract_precision<fp32>} : vector<8x128xf32>, vector<128x24xf32>, vector<8x24xf32> -> vector<8x24xf32>
    %4 = arith.mulf %0, %0 : vector<8x128xf32>
    %c1 = arith.constant 1 : index
    %c0_4 = arith.constant 0 : index
    %c0_5 = arith.constant 0 : index
    %5 = vector.load %arg2[%c1, %c0_4, %c0_5] : memref<2x128x24xf32, #tpu.memory_space<vmem>>, vector<1x128x24xf32>
    %6 = vector.shape_cast %5 : vector<1x128x24xf32> to vector<128x24xf32>
    %cst_6 = arith.constant dense<0.000000e+00> : vector<8x24xf32>
    %7 = tpu.matmul %4, %6, %cst_6 {dimension_numbers = #tpu.dot_dimension_numbers<[1], [0], [0], [1], [0, 0, 1, 1], [], []>, precision = #tpu.contract_precision<fp32>} : vector<8x128xf32>, vector<128x24xf32>, vector<8x24xf32> -> vector<8x24xf32>
    %8 = arith.addf %3, %7 : vector<8x24xf32>
    %c0_7 = arith.constant 0 : index
    %c0_8 = arith.constant 0 : index
    %9 = vector.load %arg3[%c0_7, %c0_8] : memref<1x24xf32, #tpu.memory_space<vmem>>, vector<1x24xf32>
    %10 = vector.broadcast %9 : vector<1x24xf32> to vector<8x24xf32>
    %11 = arith.addf %8, %10 : vector<8x24xf32>
    %c0_9 = arith.constant 0 : index
    %c0_10 = arith.constant 0 : index
    %12 = vector.load %arg4[%c0_9, %c0_10] : memref<8x24xf32, #tpu.memory_space<vmem>>, vector<8x24xf32>
    tpu.vector_store %arg4[%c0_9, %c0_10], %11 {strides = array<i32>} : memref<8x24xf32, #tpu.memory_space<vmem>>, vector<8x24xf32>,
    return
  }
  func.func @transform_0(%arg0: i32) -> (i32, i32) {
    %c0_i32 = arith.constant 0 : i32
    %c0_i32_0 = arith.constant 0 : i32
    return %arg0, %c0_i32 : i32, i32
  }
  func.func @transform_1(%arg0: i32) -> (i32, i32, i32) {
    %c0_i32 = arith.constant 0 : i32
    %c0_i32_0 = arith.constant 0 : i32
    %c0_i32_1 = arith.constant 0 : i32
    %c0_i32_2 = arith.constant 0 : i32
    return %c0_i32, %c0_i32_0, %c0_i32_1 : i32, i32, i32
  }
  func.func @transform_2(%arg0: i32) -> (i32, i32) {
    %c0_i32 = arith.constant 0 : i32
    %c0_i32_0 = arith.constant 0 : i32
    %c0_i32_1 = arith.constant 0 : i32
    return %c0_i32, %c0_i32_0 : i32, i32
  }
  func.func @transform_3(%arg0: i32) -> (i32, i32) {
    %c0_i32 = arith.constant 0 : i32
    %c0_i32_0 = arith.constant 0 : i32
    return %arg0, %c0_i32 : i32, i32
  }
}

</mosaic_0001>

<llo_original>
// kernel: tpu_custom_call.1
$region0: #{tpu_custom_call.1}
  #allocation0 [shape = 'u32[]', space=smem, size = 0x4, offset = 0x4, fixed_abs, tag = 'smem constant byte address 0x4 - core index']
  #allocation1 [shape = 'u32[144,128]{1,0:T(1,128)}', space=vmem, size = 0x12000, scoped, tag = 'internal scratch']
  %s0 = inlined_call_operand.vmem [shape: f32[8,128], index: 0, kind: input, shape index: {}]
  %s1 = inlined_call_operand.vmem [shape: f32[2,128,24], index: 1, kind: input, shape index: {}]
  %s2 = inlined_call_operand.vmem [shape: f32[1,24], index: 2, kind: input, shape index: {}]
  %s3 = inlined_call_operand.hbm [shape: f32[8,24], index: 3, kind: output, shape index: {}]
  %s4 = sld [smem:[#allocation0]]
  $region22: #{tpu_custom_call.1} parent=0
    _
  %s6 = ssub.s32 1, %s4
  %s7 = scalar_select 0, %s6, %s4
  $region1: #{tpu_custom_call.1} parent=0
    #allocation2 [shape = 'u8[4096]{0}', space=vmem, size = 0x1000, scoped, tag = 'output window, operand 0, single buffered']
    #allocation3 [shape = 's32[1]{0}', space=sflag, size = 0x4, scoped, tag = 'scoped memory for tpu_custom_call.1']
    %8 = vsyncpa [#allocation3], 0
    // Predicated region
    $region2: #{tpu_custom_call.1} parent=1 // pred_check
      _
    $region3: #{tpu_custom_call.1} parent=1 // pred_check_branch
      %10 = sbr.rel (0) target = $region5
    $region4: #{tpu_custom_call.1} parent=1 // pred_region
      _
    $region5: #{tpu_custom_call.1} parent=1 // pred_fallthru
      _
    // Predicated region
    $region6: #{tpu_custom_call.1} parent=1 // pred_check
      _
    $region7: #{tpu_custom_call.1} parent=1 // pred_check_branch
      %12 = sbr.rel (0) target = $region9
    $region8: #{tpu_custom_call.1} parent=1 // pred_region
      _
    $region9: #{tpu_custom_call.1} parent=1 // pred_fallthru
      _
    // Predicated region
    $region10: #{tpu_custom_call.1} parent=1 // pred_check
      _
    $region11: #{tpu_custom_call.1} parent=1 // pred_check_branch
      %14 = sbr.rel (0) target = $region13
    $region12: #{tpu_custom_call.1} parent=1 // pred_region
      _
    $region13: #{tpu_custom_call.1} parent=1 // pred_fallthru
      _
    %v15 = vld [vmem:[%s0] sm:$0xff]
    %v16 = vld [vmem:[%s1] sm:$0xff]
    %v17 = vld [vmem:[%s1 + $0x8] sm:$0xff]
    %v18 = vld [vmem:[%s1 + $0x10] sm:$0xff]
    %v19 = vld [vmem:[%s1 + $0x18] sm:$0xff]
    %v20 = vld [vmem:[%s1 + $0x20] sm:$0xff]
    %v21 = vld [vmem:[%s1 + $0x28] sm:$0xff]
    %v22 = vld [vmem:[%s1 + $0x30] sm:$0xff]
    %v23 = vld [vmem:[%s1 + $0x38] sm:$0xff]
    %v24 = vld [vmem:[%s1 + $0x40] sm:$0xff]
    %v25 = vld [vmem:[%s1 + $0x48] sm:$0xff]
    %v26 = vld [vmem:[%s1 + $0x50] sm:$0xff]
    %v27 = vld [vmem:[%s1 + $0x58] sm:$0xff]
    %v28 = vld [vmem:[%s1 + $0x60] sm:$0xff]
    %v29 = vld [vmem:[%s1 + $0x68] sm:$0xff]
    %v30 = vld [vmem:[%s1 + $0x70] sm:$0xff]
    %v31 = vld [vmem:[%s1 + $0x78] sm:$0xff]
    %v32 = vmul.f32 %v15, %v15
    %s33 = scalar_lea.vmem %s1, 128
    %v34 = vld [vmem:[%s33] sm:$0xff]
    %v35 = vld [vmem:[%s33 + $0x8] sm:$0xff]
    %v36 = vld [vmem:[%s33 + $0x10] sm:$0xff]
    %v37 = vld [vmem:[%s33 + $0x18] sm:$0xff]
    %v38 = vld [vmem:[%s33 + $0x20] sm:$0xff]
    %v39 = vld [vmem:[%s33 + $0x28] sm:$0xff]
    %v40 = vld [vmem:[%s33 + $0x30] sm:$0xff]
    %v41 = vld [vmem:[%s33 + $0x38] sm:$0xff]
    %v42 = vld [vmem:[%s33 + $0x40] sm:$0xff]
    %v43 = vld [vmem:[%s33 + $0x48] sm:$0xff]
    %v44 = vld [vmem:[%s33 + $0x50] sm:$0xff]
    %v45 = vld [vmem:[%s33 + $0x58] sm:$0xff]
    %v46 = vld [vmem:[%s33 + $0x60] sm:$0xff]
    %v47 = vld [vmem:[%s33 + $0x68] sm:$0xff]
    %v48 = vld [vmem:[%s33 + $0x70] sm:$0xff]
    %v49 = vld [vmem:[%s33 + $0x78] sm:$0xff]
    %50 = vmatprep.subr.mxu0 0.0
    %v51 = vand.u32 %v34, 4294901760
    %52 = vmatpush1.msra.mxu0 %v51
    %53 = vmatprep.subr.mxu0 0.0
    %v54 = vand.u32 %v35, 4294901760
    %55 = vmatpush1.msra.mxu0 %v54
    %56 = vmatprep.subr.mxu0 0.0
    %v57 = vand.u32 %v36, 4294901760
    %58 = vmatpush1.msra.mxu0 %v57
    %59 = vmatprep.subr.mxu0 0.0
    %v60 = vand.u32 %v37, 4294901760
    %61 = vmatpush1.msra.mxu0 %v60
    %62 = vmatprep.subr.mxu0 0.0
    %v63 = vand.u32 %v38, 4294901760
    %64 = vmatpush1.msra.mxu0 %v63
    %65 = vmatprep.subr.mxu0 0.0
    %v66 = vand.u32 %v39, 4294901760
    %67 = vmatpush1.msra.mxu0 %v66
    %68 = vmatprep.subr.mxu0 0.0
    %v69 = vand.u32 %v40, 4294901760
    %70 = vmatpush1.msra.mxu0 %v69
    %71 = vmatprep.subr.mxu0 0.0
    %v72 = vand.u32 %v41, 4294901760
    %73 = vmatpush1.msra.mxu0 %v72
    %74 = vmatprep.subr.mxu0 0.0
    %v75 = vand.u32 %v42, 4294901760
    %76 = vmatpush1.msra.mxu0 %v75
    %77 = vmatprep.subr.mxu0 0.0
    %v78 = vand.u32 %v43, 4294901760
    %79 = vmatpush1.msra.mxu0 %v78
    %80 = vmatprep.subr.mxu0 0.0
    %v81 = vand.u32 %v44, 4294901760
    %82 = vmatpush1.msra.mxu0 %v81
    %83 = vmatprep.subr.mxu0 0.0
    %v84 = vand.u32 %v45, 4294901760
    %85 = vmatpush1.msra.mxu0 %v84
    %86 = vmatprep.subr.mxu0 0.0
    %v87 = vand.u32 %v46, 4294901760
    %88 = vmatpush1.msra.mxu0 %v87
    %89 = vmatprep.subr.mxu0 0.0
    %v90 = vand.u32 %v47, 4294901760
    %91 = vmatpush1.msra.mxu0 %v90
    %92 = vmatprep.subr.mxu0 0.0
    %v93 = vand.u32 %v48, 4294901760
    %94 = vmatpush1.msra.mxu0 %v93
    %95 = vmatprep.subr.mxu0 0.0
    %v96 = vand.u32 %v49, 4294901760
    %97 = vmatpush1.msra.mxu0 %v96
    %98 = vmatprep.subr.mxu0 0.0
    %99 = vmatpush1.msra.mxu0 0.0
    %100 = vmatprep.subr.mxu0 0.0
    %101 = vmatpush1.msra.mxu0 0.0
    %102 = vmatprep.subr.mxu0 0.0
    %103 = vmatpush1.msra.mxu0 0.0
    %104 = vmatprep.subr.mxu0 0.0
    %105 = vmatpush1.msra.mxu0 0.0
    %106 = vmatprep.subr.mxu0 0.0
    %107 = vmatpush1.msra.mxu0 0.0
    %108 = vmatprep.subr.mxu0 0.0
    %109 = vmatpush1.msra.mxu0 0.0
    %110 = vmatprep.subr.mxu0 0.0
    %111 = vmatpush1.msra.mxu0 0.0
    %112 = vmatprep.subr.mxu0 0.0
    %113 = vmatpush1.msra.mxu0 0.0
    %114 = vmatprep.subr.mxu0 0.0
    %115 = vmatpush1.msra.mxu0 0.0
    %116 = vmatprep.subr.mxu0 0.0
    %117 = vmatpush1.msra.mxu0 0.0
    %118 = vmatprep.subr.mxu0 0.0
    %119 = vmatpush1.msra.mxu0 0.0
    %120 = vmatprep.subr.mxu0 0.0
    %121 = vmatpush1.msra.mxu0 0.0
    %122 = vmatprep.subr.mxu0 0.0
    %123 = vmatpush1.msra.mxu0 0.0
    %124 = vmatprep.subr.mxu0 0.0
    %125 = vmatpush1.msra.mxu0 0.0
    %126 = vmatprep.subr.mxu0 0.0
    %127 = vmatpush1.msra.mxu0 0.0
    %128 = vmatprep.subr.mxu0 0.0
    %129 = vmatpush1.msra.mxu0 0.0
    %130 = vmatprep.mubr.f32.mxu0 0.0
    %v131 = vand.u32 %v32, 4294901760
    %v132 = vsub.f32 %v32, %v131
    %v133 = vand.u32 %v132, 4294901760
    %v134 = vsub.f32 %v132, %v133
    %v135 = vand.u32 %v134, 4294901760
    %136 = vmatmul.mubr.f32.gmra.mrb[0].mxu0 %v135
    %v137 = vpop.f32.mrb[0].mxu0
    %v138 = vadd.f32 0.0, %v137
    %v139 = vpop.f32.mrb[0].mxu0
    %140 = vdwg.mxu0
    %141 = vmatprep.subr.mxu0 0.0
    %v142 = vand.u32 %v34, 4294901760
    %v143 = vsub.f32 %v34, %v142
    %v144 = vand.u32 %v143, 4294901760
    %v145 = vsub.f32 %v143, %v144
    %v146 = vand.u32 %v145, 4294901760
    %147 = vmatpush1.msra.mxu0 %v146
    %148 = vmatprep.subr.mxu0 0.0
    %v149 = vand.u32 %v35, 4294901760
    %v150 = vsub.f32 %v35, %v149
    %v151 = vand.u32 %v150, 4294901760
    %v152 = vsub.f32 %v150, %v151
    %v153 = vand.u32 %v152, 4294901760
    %154 = vmatpush1.msra.mxu0 %v153
    %155 = vmatprep.subr.mxu0 0.0
    %v156 = vand.u32 %v36, 4294901760
    %v157 = vsub.f32 %v36, %v156
    %v158 = vand.u32 %v157, 4294901760
    %v159 = vsub.f32 %v157, %v158
    %v160 = vand.u32 %v159, 4294901760
    %161 = vmatpush1.msra.mxu0 %v160
    %162 = vmatprep.subr.mxu0 0.0
    %v163 = vand.u32 %v37, 4294901760
    %v164 = vsub.f32 %v37, %v163
    %v165 = vand.u32 %v164, 4294901760
    %v166 = vsub.f32 %v164, %v165
    %v167 = vand.u32 %v166, 4294901760
    %168 = vmatpush1.msra.mxu0 %v167
    %169 = vmatprep.subr.mxu0 0.0
    %v170 = vand.u32 %v38, 4294901760
    %v171 = vsub.f32 %v38, %v170
    %v172 = vand.u32 %v171, 4294901760
    %v173 = vsub.f32 %v171, %v172
    %v174 = vand.u32 %v173, 4294901760
    %175 = vmatpush1.msra.mxu0 %v174
    %176 = vmatprep.subr.mxu0 0.0
    %v177 = vand.u32 %v39, 4294901760
    %v178 = vsub.f32 %v39, %v177
    %v179 = vand.u32 %v178, 4294901760
    %v180 = vsub.f32 %v178, %v179
    %v181 = vand.u32 %v180, 4294901760
    %182 = vmatpush1.msra.mxu0 %v181
    %183 = vmatprep.subr.mxu0 0.0
    %v184 = vand.u32 %v40, 4294901760
    %v185 = vsub.f32 %v40, %v184
    %v186 = vand.u32 %v185, 4294901760
    %v187 = vsub.f32 %v185, %v186
    %v188 = vand.u32 %v187, 4294901760
    %189 = vmatpush1.msra.mxu0 %v188
    %190 = vmatprep.subr.mxu0 0.0
    %v191 = vand.u32 %v41, 4294901760
    %v192 = vsub.f32 %v41, %v191
    %v193 = vand.u32 %v192, 4294901760
    %v194 = vsub.f32 %v192, %v193
    %v195 = vand.u32 %v194, 4294901760
    %196 = vmatpush1.msra.mxu0 %v195
    %197 = vmatprep.subr.mxu0 0.0
    %v198 = vand.u32 %v42, 4294901760
    %v199 = vsub.f32 %v42, %v198
    %v200 = vand.u32 %v199, 4294901760
    %v201 = vsub.f32 %v199, %v200
    %v202 = vand.u32 %v201, 4294901760
    %203 = vmatpush1.msra.mxu0 %v202
    %204 = vmatprep.subr.mxu0 0.0
    %v205 = vand.u32 %v43, 4294901760
    %v206 = vsub.f32 %v43, %v205
    %v207 = vand.u32 %v206, 4294901760
    %v208 = vsub.f32 %v206, %v207
    %v209 = vand.u32 %v208, 4294901760
    %210 = vmatpush1.msra.mxu0 %v209
    %211 = vmatprep.subr.mxu0 0.0
    %v212 = vand.u32 %v44, 4294901760
    %v213 = vsub.f32 %v44, %v212
    %v214 = vand.u32 %v213, 4294901760
    %v215 = vsub.f32 %v213, %v214
    %v216 = vand.u32 %v215, 4294901760
    %217 = vmatpush1.msra.mxu0 %v216
    %218 = vmatprep.subr.mxu0 0.0
    %v219 = vand.u32 %v45, 4294901760
    %v220 = vsub.f32 %v45, %v219
    %v221 = vand.u32 %v220, 4294901760
    %v222 = vsub.f32 %v220, %v221
    %v223 = vand.u32 %v222, 4294901760
    %224 = vmatpush1.msra.mxu0 %v223
    %225 = vmatprep.subr.mxu0 0.0
    %v226 = vand.u32 %v46, 4294901760
    %v227 = vsub.f32 %v46, %v226
    %v228 = vand.u32 %v227, 4294901760
    %v229 = vsub.f32 %v227, %v228
    %v230 = vand.u32 %v229, 4294901760
    %231 = vmatpush1.msra.mxu0 %v230
    %232 = vmatprep.subr.mxu0 0.0
    %v233 = vand.u32 %v47, 4294901760
    %v234 = vsub.f32 %v47, %v233
    %v235 = vand.u32 %v234, 4294901760
    %v236 = vsub.f32 %v234, %v235
    %v237 = vand.u32 %v236, 4294901760
    %238 = vmatpush1.msra.mxu0 %v237
    %239 = vmatprep.subr.mxu0 0.0
    %v240 = vand.u32 %v48, 4294901760
    %v241 = vsub.f32 %v48, %v240
    %v242 = vand.u32 %v241, 4294901760
    %v243 = vsub.f32 %v241, %v242
    %v244 = vand.u32 %v243, 4294901760
    %245 = vmatpush1.msra.mxu0 %v244
    %246 = vmatprep.subr.mxu0 0.0
    %v247 = vand.u32 %v49, 4294901760
    %v248 = vsub.f32 %v49, %v247
    %v249 = vand.u32 %v248, 4294901760
    %v250 = vsub.f32 %v248, %v249
    %v251 = vand.u32 %v250, 4294901760
    %252 = vmatpush1.msra.mxu0 %v251
    %253 = vmatprep.subr.mxu0 0.0
    %254 = vmatpush1.msra.mxu0 0.0
    %255 = vmatprep.subr.mxu0 0.0
    %256 = vmatpush1.msra.mxu0 0.0
    %257 = vmatprep.subr.mxu0 0.0
    %258 = vmatpush1.msra.mxu0 0.0
    %259 = vmatprep.subr.mxu0 0.0
    %260 = vmatpush1.msra.mxu0 0.0
    %261 = vmatprep.subr.mxu0 0.0
    %262 = vmatpush1.msra.mxu0 0.0
    %263 = vmatprep.subr.mxu0 0.0
    %264 = vmatpush1.msra.mxu0 0.0
    %265 = vmatprep.subr.mxu0 0.0
    %266 = vmatpush1.msra.mxu0 0.0
    %267 = vmatprep.subr.mxu0 0.0
    %268 = vmatpush1.msra.mxu0 0.0
    %269 = vmatprep.subr.mxu0 0.0
    %270 = vmatpush1.msra.mxu0 0.0
    %271 = vmatprep.subr.mxu0 0.0
    %272 = vmatpush1.msra.mxu0 0.0
    %273 = vmatprep.subr.mxu0 0.0
    %274 = vmatpush1.msra.mxu0 0.0
    %275 = vmatprep.subr.mxu0 0.0
    %276 = vmatpush1.msra.mxu0 0.0
    %277 = vmatprep.subr.mxu0 0.0
    %278 = vmatpush1.msra.mxu0 0.0
    %279 = vmatprep.subr.mxu0 0.0
    %280 = vmatpush1.msra.mxu0 0.0
    %281 = vmatprep.subr.mxu0 0.0
    %282 = vmatpush1.msra.mxu0 0.0
    %283 = vmatprep.subr.mxu0 0.0
    %284 = vmatpush1.msra.mxu0 0.0
    %285 = vmatprep.mubr.f32.mxu0 0.0
    %v286 = vand.u32 %v32, 4294901760
    %287 = vmatmul.mubr.f32.gmra.mrb[0].mxu0 %v286
    %v288 = vpop.f32.mrb[0].mxu0
    %v289 = vadd.f32 %v138, %v288
    %v290 = vpop.f32.mrb[0].mxu0
    %291 = vdwg.mxu0
    %292 = vmatprep.subr.mxu0 0.0
    %v293 = vand.u32 %v34, 4294901760
    %v294 = vsub.f32 %v34, %v293
    %295 = vmatpush1.msra.mxu0 %v294
    %296 = vmatprep.subr.mxu0 0.0
    %v297 = vand.u32 %v35, 4294901760
    %v298 = vsub.f32 %v35, %v297
    %299 = vmatpush1.msra.mxu0 %v298
    %300 = vmatprep.subr.mxu0 0.0
    %v301 = vand.u32 %v36, 4294901760
    %v302 = vsub.f32 %v36, %v301
    %303 = vmatpush1.msra.mxu0 %v302
    %304 = vmatprep.subr.mxu0 0.0
    %v305 = vand.u32 %v37, 4294901760
    %v306 = vsub.f32 %v37, %v305
    %307 = vmatpush1.msra.mxu0 %v306
    %308 = vmatprep.subr.mxu0 0.0
    %v309 = vand.u32 %v38, 4294901760
    %v310 = vsub.f32 %v38, %v309
    %311 = vmatpush1.msra.mxu0 %v310
    %312 = vmatprep.subr.mxu0 0.0
    %v313 = vand.u32 %v39, 4294901760
    %v314 = vsub.f32 %v39, %v313
    %315 = vmatpush1.msra.mxu0 %v314
    %316 = vmatprep.subr.mxu0 0.0
    %v317 = vand.u32 %v40, 4294901760
    %v318 = vsub.f32 %v40, %v317
    %319 = vmatpush1.msra.mxu0 %v318
    %320 = vmatprep.subr.mxu0 0.0
    %v321 = vand.u32 %v41, 4294901760
    %v322 = vsub.f32 %v41, %v321
    %323 = vmatpush1.msra.mxu0 %v322
    %324 = vmatprep.subr.mxu0 0.0
    %v325 = vand.u32 %v42, 4294901760
    %v326 = vsub.f32 %v42, %v325
    %327 = vmatpush1.msra.mxu0 %v326
    %328 = vmatprep.subr.mxu0 0.0
    %v329 = vand.u32 %v43, 4294901760
    %v330 = vsub.f32 %v43, %v329
    %331 = vmatpush1.msra.mxu0 %v330
    %332 = vmatprep.subr.mxu0 0.0
    %v333 = vand.u32 %v44, 4294901760
    %v334 = vsub.f32 %v44, %v333
    %335 = vmatpush1.msra.mxu0 %v334
    %336 = vmatprep.subr.mxu0 0.0
    %v337 = vand.u32 %v45, 4294901760
    %v338 = vsub.f32 %v45, %v337
    %339 = vmatpush1.msra.mxu0 %v338
    %340 = vmatprep.subr.mxu0 0.0
    %v341 = vand.u32 %v46, 4294901760
    %v342 = vsub.f32 %v46, %v341
    %343 = vmatpush1.msra.mxu0 %v342
    %344 = vmatprep.subr.mxu0 0.0
    %v345 = vand.u32 %v47, 4294901760
    %v346 = vsub.f32 %v47, %v345
    %347 = vmatpush1.msra.mxu0 %v346
    %348 = vmatprep.subr.mxu0 0.0
    %v349 = vand.u32 %v48, 4294901760
    %v350 = vsub.f32 %v48, %v349
    %351 = vmatpush1.msra.mxu0 %v350
    %352 = vmatprep.subr.mxu0 0.0
    %v353 = vand.u32 %v49, 4294901760
    %v354 = vsub.f32 %v49, %v353
    %355 = vmatpush1.msra.mxu0 %v354
    %356 = vmatprep.subr.mxu0 0.0
    %357 = vmatpush1.msra.mxu0 0.0
    %358 = vmatprep.subr.mxu0 0.0
    %359 = vmatpush1.msra.mxu0 0.0
    %360 = vmatprep.subr.mxu0 0.0
    %361 = vmatpush1.msra.mxu0 0.0
    %362 = vmatprep.subr.mxu0 0.0
    %363 = vmatpush1.msra.mxu0 0.0
    %364 = vmatprep.subr.mxu0 0.0
    %365 = vmatpush1.msra.mxu0 0.0
    %366 = vmatprep.subr.mxu0 0.0
    %367 = vmatpush1.msra.mxu0 0.0
    %368 = vmatprep.subr.mxu0 0.0
    %369 = vmatpush1.msra.mxu0 0.0
    %370 = vmatprep.subr.mxu0 0.0
    %371 = vmatpush1.msra.mxu0 0.0
    %372 = vmatprep.subr.mxu0 0.0
    %373 = vmatpush1.msra.mxu0 0.0
    %374 = vmatprep.subr.mxu0 0.0
    %375 = vmatpush1.msra.mxu0 0.0
    %376 = vmatprep.subr.mxu0 0.0
    %377 = vmatpush1.msra.mxu0 0.0
    %378 = vmatprep.subr.mxu0 0.0
    %379 = vmatpush1.msra.mxu0 0.0
    %380 = vmatprep.subr.mxu0 0.0
    %381 = vmatpush1.msra.mxu0 0.0
    %382 = vmatprep.subr.mxu0 0.0
    %383 = vmatpush1.msra.mxu0 0.0
    %384 = vmatprep.subr.mxu0 0.0
    %385 = vmatpush1.msra.mxu0 0.0
    %386 = vmatprep.subr.mxu0 0.0
    %387 = vmatpush1.msra.mxu0 0.0
    %388 = vmatprep.mubr.f32.mxu0 0.0
    %v389 = vand.u32 %v32, 4294901760
    %v390 = vsub.f32 %v32, %v389
    %391 = vmatmul.mubr.f32.gmra.mrb[0].mxu0 %v390
    %v392 = vpop.f32.mrb[0].mxu0
    %v393 = vadd.f32 %v289, %v392
    %v394 = vpop.f32.mrb[0].mxu0
    %395 = vdwg.mxu0
    %396 = vmatprep.subr.mxu0 0.0
    %v397 = vand.u32 %v34, 4294901760
    %398 = vmatpush1.msra.mxu0 %v397
    %399 = vmatprep.subr.mxu0 0.0
    %v400 = vand.u32 %v35, 4294901760
    %401 = vmatpush1.msra.mxu0 %v400
    %402 = vmatprep.subr.mxu0 0.0
    %v403 = vand.u32 %v36, 4294901760
    %404 = vmatpush1.msra.mxu0 %v403
    %405 = vmatprep.subr.mxu0 0.0
    %v406 = vand.u32 %v37, 4294901760
    %407 = vmatpush1.msra.mxu0 %v406
    %408 = vmatprep.subr.mxu0 0.0
    %v409 = vand.u32 %v38, 4294901760
    %410 = vmatpush1.msra.mxu0 %v409
    %411 = vmatprep.subr.mxu0 0.0
    %v412 = vand.u32 %v39, 4294901760
    %413 = vmatpush1.msra.mxu0 %v412
    %414 = vmatprep.subr.mxu0 0.0
    %v415 = vand.u32 %v40, 4294901760
    %416 = vmatpush1.msra.mxu0 %v415
    %417 = vmatprep.subr.mxu0 0.0
    %v418 = vand.u32 %v41, 4294901760
    %419 = vmatpush1.msra.mxu0 %v418
    %420 = vmatprep.subr.mxu0 0.0
    %v421 = vand.u32 %v42, 4294901760
    %422 = vmatpush1.msra.mxu0 %v421
    %423 = vmatprep.subr.mxu0 0.0
    %v424 = vand.u32 %v43, 4294901760
    %425 = vmatpush1.msra.mxu0 %v424
    %426 = vmatprep.subr.mxu0 0.0
    %v427 = vand.u32 %v44, 4294901760
    %428 = vmatpush1.msra.mxu0 %v427
    %429 = vmatprep.subr.mxu0 0.0
    %v430 = vand.u32 %v45, 4294901760
    %431 = vmatpush1.msra.mxu0 %v430
    %432 = vmatprep.subr.mxu0 0.0
    %v433 = vand.u32 %v46, 4294901760
    %434 = vmatpush1.msra.mxu0 %v433
    %435 = vmatprep.subr.mxu0 0.0
    %v436 = vand.u32 %v47, 4294901760
    %437 = vmatpush1.msra.mxu0 %v436
    %438 = vmatprep.subr.mxu0 0.0
    %v439 = vand.u32 %v48, 4294901760
    %440 = vmatpush1.msra.mxu0 %v439
    %441 = vmatprep.subr.mxu0 0.0
    %v442 = vand.u32 %v49, 4294901760
    %443 = vmatpush1.msra.mxu0 %v442
    %444 = vmatprep.subr.mxu0 0.0
    %445 = vmatpush1.msra.mxu0 0.0
    %446 = vmatprep.subr.mxu0 0.0
    %447 = vmatpush1.msra.mxu0 0.0
    %448 = vmatprep.subr.mxu0 0.0
    %449 = vmatpush1.msra.mxu0 0.0
    %450 = vmatprep.subr.mxu0 0.0
    %451 = vmatpush1.msra.mxu0 0.0
    %452 = vmatprep.subr.mxu0 0.0
    %453 = vmatpush1.msra.mxu0 0.0
    %454 = vmatprep.subr.mxu0 0.0
    %455 = vmatpush1.msra.mxu0 0.0
    %456 = vmatprep.subr.mxu0 0.0
    %457 = vmatpush1.msra.mxu0 0.0
    %458 = vmatprep.subr.mxu0 0.0
    %459 = vmatpush1.msra.mxu0 0.0
    %460 = vmatprep.subr.mxu0 0.0
    %461 = vmatpush1.msra.mxu0 0.0
    %462 = vmatprep.subr.mxu0 0.0
    %463 = vmatpush1.msra.mxu0 0.0
    %464 = vmatprep.subr.mxu0 0.0
    %465 = vmatpush1.msra.mxu0 0.0
    %466 = vmatprep.subr.mxu0 0.0
    %467 = vmatpush1.msra.mxu0 0.0
    %468 = vmatprep.subr.mxu0 0.0
    %469 = vmatpush1.msra.mxu0 0.0
    %470 = vmatprep.subr.mxu0 0.0
    %471 = vmatpush1.msra.mxu0 0.0
    %472 = vmatprep.subr.mxu0 0.0
    %473 = vmatpush1.msra.mxu0 0.0
    %474 = vmatprep.subr.mxu0 0.0
    %475 = vmatpush1.msra.mxu0 0.0
    %476 = vmatprep.mubr.f32.mxu0 0.0
    %v477 = vand.u32 %v32, 4294901760
    %v478 = vsub.f32 %v32, %v477
    %v479 = vand.u32 %v478, 4294901760
    %480 = vmatmul.mubr.f32.gmra.mrb[0].mxu0 %v479
    %v481 = vpop.f32.mrb[0].mxu0
    %v482 = vadd.f32 %v393, %v481
    %v483 = vpop.f32.mrb[0].mxu0
    %484 = vdwg.mxu0
    %485 = vmatprep.subr.mxu0 0.0
    %v486 = vand.u32 %v34, 4294901760
    %v487 = vsub.f32 %v34, %v486
    %v488 = vand.u32 %v487, 4294901760
    %489 = vmatpush1.msra.mxu0 %v488
    %490 = vmatprep.subr.mxu0 0.0
    %v491 = vand.u32 %v35, 4294901760
    %v492 = vsub.f32 %v35, %v491
    %v493 = vand.u32 %v492, 4294901760
    %494 = vmatpush1.msra.mxu0 %v493
    %495 = vmatprep.subr.mxu0 0.0
    %v496 = vand.u32 %v36, 4294901760
    %v497 = vsub.f32 %v36, %v496
    %v498 = vand.u32 %v497, 4294901760
    %499 = vmatpush1.msra.mxu0 %v498
    %500 = vmatprep.subr.mxu0 0.0
    %v501 = vand.u32 %v37, 4294901760
    %v502 = vsub.f32 %v37, %v501
    %v503 = vand.u32 %v502, 4294901760
    %504 = vmatpush1.msra.mxu0 %v503
    %505 = vmatprep.subr.mxu0 0.0
    %v506 = vand.u32 %v38, 4294901760
    %v507 = vsub.f32 %v38, %v506
    %v508 = vand.u32 %v507, 4294901760
    %509 = vmatpush1.msra.mxu0 %v508
    %510 = vmatprep.subr.mxu0 0.0
    %v511 = vand.u32 %v39, 4294901760
    %v512 = vsub.f32 %v39, %v511
    %v513 = vand.u32 %v512, 4294901760
    %514 = vmatpush1.msra.mxu0 %v513
    %515 = vmatprep.subr.mxu0 0.0
    %v516 = vand.u32 %v40, 4294901760
    %v517 = vsub.f32 %v40, %v516
    %v518 = vand.u32 %v517, 4294901760
    %519 = vmatpush1.msra.mxu0 %v518
    %520 = vmatprep.subr.mxu0 0.0
    %v521 = vand.u32 %v41, 4294901760
    %v522 = vsub.f32 %v41, %v521
    %v523 = vand.u32 %v522, 4294901760
    %524 = vmatpush1.msra.mxu0 %v523
    %525 = vmatprep.subr.mxu0 0.0
    %v526 = vand.u32 %v42, 4294901760
    %v527 = vsub.f32 %v42, %v526
    %v528 = vand.u32 %v527, 4294901760
    %529 = vmatpush1.msra.mxu0 %v528
    %530 = vmatprep.subr.mxu0 0.0
    %v531 = vand.u32 %v43, 4294901760
    %v532 = vsub.f32 %v43, %v531
    %v533 = vand.u32 %v532, 4294901760
    %534 = vmatpush1.msra.mxu0 %v533
    %535 = vmatprep.subr.mxu0 0.0
    %v536 = vand.u32 %v44, 4294901760
    %v537 = vsub.f32 %v44, %v536
    %v538 = vand.u32 %v537, 4294901760
    %539 = vmatpush1.msra.mxu0 %v538
    %540 = vmatprep.subr.mxu0 0.0
    %v541 = vand.u32 %v45, 4294901760
    %v542 = vsub.f32 %v45, %v541
    %v543 = vand.u32 %v542, 4294901760
    %544 = vmatpush1.msra.mxu0 %v543
    %545 = vmatprep.subr.mxu0 0.0
    %v546 = vand.u32 %v46, 4294901760
    %v547 = vsub.f32 %v46, %v546
    %v548 = vand.u32 %v547, 4294901760
    %549 = vmatpush1.msra.mxu0 %v548
    %550 = vmatprep.subr.mxu0 0.0
    %v551 = vand.u32 %v47, 4294901760
    %v552 = vsub.f32 %v47, %v551
    %v553 = vand.u32 %v552, 4294901760
    %554 = vmatpush1.msra.mxu0 %v553
    %555 = vmatprep.subr.mxu0 0.0
    %v556 = vand.u32 %v48, 4294901760
    %v557 = vsub.f32 %v48, %v556
    %v558 = vand.u32 %v557, 4294901760
    %559 = vmatpush1.msra.mxu0 %v558
    %560 = vmatprep.subr.mxu0 0.0
    %v561 = vand.u32 %v49, 4294901760
    %v562 = vsub.f32 %v49, %v561
    %v563 = vand.u32 %v562, 4294901760
    %564 = vmatpush1.msra.mxu0 %v563
    %565 = vmatprep.subr.mxu0 0.0
    %566 = vmatpush1.msra.mxu0 0.0
    %567 = vmatprep.subr.mxu0 0.0
    %568 = vmatpush1.msra.mxu0 0.0
    %569 = vmatprep.subr.mxu0 0.0
    %570 = vmatpush1.msra.mxu0 0.0
    %571 = vmatprep.subr.mxu0 0.0
    %572 = vmatpush1.msra.mxu0 0.0
    %573 = vmatprep.subr.mxu0 0.0
    %574 = vmatpush1.msra.mxu0 0.0
    %575 = vmatprep.subr.mxu0 0.0
    %576 = vmatpush1.msra.mxu0 0.0
    %577 = vmatprep.subr.mxu0 0.0
    %578 = vmatpush1.msra.mxu0 0.0
    %579 = vmatprep.subr.mxu0 0.0
    %580 = vmatpush1.msra.mxu0 0.0
    %581 = vmatprep.subr.mxu0 0.0
    %582 = vmatpush1.msra.mxu0 0.0
    %583 = vmatprep.subr.mxu0 0.0
    %584 = vmatpush1.msra.mxu0 0.0
    %585 = vmatprep.subr.mxu0 0.0
    %586 = vmatpush1.msra.mxu0 0.0
    %587 = vmatprep.subr.mxu0 0.0
    %588 = vmatpush1.msra.mxu0 0.0
    %589 = vmatprep.subr.mxu0 0.0
    %590 = vmatpush1.msra.mxu0 0.0
    %591 = vmatprep.subr.mxu0 0.0
    %592 = vmatpush1.msra.mxu0 0.0
    %593 = vmatprep.subr.mxu0 0.0
    %594 = vmatpush1.msra.mxu0 0.0
    %595 = vmatprep.subr.mxu0 0.0
    %596 = vmatpush1.msra.mxu0 0.0
    %597 = vmatprep.mubr.f32.mxu0 0.0
    %v598 = vand.u32 %v32, 4294901760
    %599 = vmatmul.mubr.f32.gmra.mrb[0].mxu0 %v598
    %v600 = vpop.f32.mrb[0].mxu0
    %v601 = vadd.f32 %v482, %v600
    %v602 = vpop.f32.mrb[0].mxu0
    %603 = vdwg.mxu0
    %604 = vmatprep.subr.mxu0 0.0
    %v605 = vand.u32 %v34, 4294901760
    %606 = vmatpush1.msra.mxu0 %v605
    %607 = vmatprep.subr.mxu0 0.0
    %v608 = vand.u32 %v35, 4294901760
    %609 = vmatpush1.msra.mxu0 %v608
    %610 = vmatprep.subr.mxu0 0.0
    %v611 = vand.u32 %v36, 4294901760
    %612 = vmatpush1.msra.mxu0 %v611
    %613 = vmatprep.subr.mxu0 0.0
    %v614 = vand.u32 %v37, 4294901760
    %615 = vmatpush1.msra.mxu0 %v614
    %616 = vmatprep.subr.mxu0 0.0
    %v617 = vand.u32 %v38, 4294901760
    %618 = vmatpush1.msra.mxu0 %v617
    %619 = vmatprep.subr.mxu0 0.0
    %v620 = vand.u32 %v39, 4294901760
    %621 = vmatpush1.msra.mxu0 %v620
    %622 = vmatprep.subr.mxu0 0.0
    %v623 = vand.u32 %v40, 4294901760
    %624 = vmatpush1.msra.mxu0 %v623
    %625 = vmatprep.subr.mxu0 0.0
    %v626 = vand.u32 %v41, 4294901760
    %627 = vmatpush1.msra.mxu0 %v626
    %628 = vmatprep.subr.mxu0 0.0
    %v629 = vand.u32 %v42, 4294901760
    %630 = vmatpush1.msra.mxu0 %v629
    %631 = vmatprep.subr.mxu0 0.0
    %v632 = vand.u32 %v43, 4294901760
    %633 = vmatpush1.msra.mxu0 %v632
    %634 = vmatprep.subr.mxu0 0.0
    %v635 = vand.u32 %v44, 4294901760
    %636 = vmatpush1.msra.mxu0 %v635
    %637 = vmatprep.subr.mxu0 0.0
    %v638 = vand.u32 %v45, 4294901760
    %639 = vmatpush1.msra.mxu0 %v638
    %640 = vmatprep.subr.mxu0 0.0
    %v641 = vand.u32 %v46, 4294901760
    %642 = vmatpush1.msra.mxu0 %v641
    %643 = vmatprep.subr.mxu0 0.0
    %v644 = vand.u32 %v47, 4294901760
    %645 = vmatpush1.msra.mxu0 %v644
    %646 = vmatprep.subr.mxu0 0.0
    %v647 = vand.u32 %v48, 4294901760
    %648 = vmatpush1.msra.mxu0 %v647
    %649 = vmatprep.subr.mxu0 0.0
    %v650 = vand.u32 %v49, 4294901760
    %651 = vmatpush1.msra.mxu0 %v650
    %652 = vmatprep.subr.mxu0 0.0
    %653 = vmatpush1.msra.mxu0 0.0
    %654 = vmatprep.subr.mxu0 0.0
    %655 = vmatpush1.msra.mxu0 0.0
    %656 = vmatprep.subr.mxu0 0.0
    %657 = vmatpush1.msra.mxu0 0.0
    %658 = vmatprep.subr.mxu0 0.0
    %659 = vmatpush1.msra.mxu0 0.0
    %660 = vmatprep.subr.mxu0 0.0
    %661 = vmatpush1.msra.mxu0 0.0
    %662 = vmatprep.subr.mxu0 0.0
    %663 = vmatpush1.msra.mxu0 0.0
    %664 = vmatprep.subr.mxu0 0.0
    %665 = vmatpush1.msra.mxu0 0.0
    %666 = vmatprep.subr.mxu0 0.0
    %667 = vmatpush1.msra.mxu0 0.0
    %668 = vmatprep.subr.mxu0 0.0
    %669 = vmatpush1.msra.mxu0 0.0
    %670 = vmatprep.subr.mxu0 0.0
    %671 = vmatpush1.msra.mxu0 0.0
    %672 = vmatprep.subr.mxu0 0.0
    %673 = vmatpush1.msra.mxu0 0.0
    %674 = vmatprep.subr.mxu0 0.0
    %675 = vmatpush1.msra.mxu0 0.0
    %676 = vmatprep.subr.mxu0 0.0
    %677 = vmatpush1.msra.mxu0 0.0
    %678 = vmatprep.subr.mxu0 0.0
    %679 = vmatpush1.msra.mxu0 0.0
    %680 = vmatprep.subr.mxu0 0.0
    %681 = vmatpush1.msra.mxu0 0.0
    %682 = vmatprep.subr.mxu0 0.0
    %683 = vmatpush1.msra.mxu0 0.0
    %684 = vmatprep.mubr.f32.mxu0 0.0
    %v685 = vand.u32 %v32, 4294901760
    %686 = vmatmul.mubr.f32.gmra.mrb[0].mxu0 %v685
    %v687 = vpop.f32.mrb[0].mxu0
    %v688 = vadd.f32 %v601, %v687
    %v689 = vpop.f32.mrb[0].mxu0
    %690 = vdwg.mxu0
    %691 = vmatprep.subr.mxu0 0.0
    %v692 = vand.u32 %v16, 4294901760
    %693 = vmatpush1.msra.mxu0 %v692
    %694 = vmatprep.subr.mxu0 0.0
    %v695 = vand.u32 %v17, 4294901760
    %696 = vmatpush1.msra.mxu0 %v695
    %697 = vmatprep.subr.mxu0 0.0
    %v698 = vand.u32 %v18, 4294901760
    %699 = vmatpush1.msra.mxu0 %v698
    %700 = vmatprep.subr.mxu0 0.0
    %v701 = vand.u32 %v19, 4294901760
    %702 = vmatpush1.msra.mxu0 %v701
    %703 = vmatprep.subr.mxu0 0.0
    %v704 = vand.u32 %v20, 4294901760
    %705 = vmatpush1.msra.mxu0 %v704
    %706 = vmatprep.subr.mxu0 0.0
    %v707 = vand.u32 %v21, 4294901760
    %708 = vmatpush1.msra.mxu0 %v707
    %709 = vmatprep.subr.mxu0 0.0
    %v710 = vand.u32 %v22, 4294901760
    %711 = vmatpush1.msra.mxu0 %v710
    %712 = vmatprep.subr.mxu0 0.0
    %v713 = vand.u32 %v23, 4294901760
    %714 = vmatpush1.msra.mxu0 %v713
    %715 = vmatprep.subr.mxu0 0.0
    %v716 = vand.u32 %v24, 4294901760
    %717 = vmatpush1.msra.mxu0 %v716
    %718 = vmatprep.subr.mxu0 0.0
    %v719 = vand.u32 %v25, 4294901760
    %720 = vmatpush1.msra.mxu0 %v719
    %721 = vmatprep.subr.mxu0 0.0
    %v722 = vand.u32 %v26, 4294901760
    %723 = vmatpush1.msra.mxu0 %v722
    %724 = vmatprep.subr.mxu0 0.0
    %v725 = vand.u32 %v27, 4294901760
    %726 = vmatpush1.msra.mxu0 %v725
    %727 = vmatprep.subr.mxu0 0.0
    %v728 = vand.u32 %v28, 4294901760
    %729 = vmatpush1.msra.mxu0 %v728
    %730 = vmatprep.subr.mxu0 0.0
    %v731 = vand.u32 %v29, 4294901760
    %732 = vmatpush1.msra.mxu0 %v731
    %733 = vmatprep.subr.mxu0 0.0
    %v734 = vand.u32 %v30, 4294901760
    %735 = vmatpush1.msra.mxu0 %v734
    %736 = vmatprep.subr.mxu0 0.0
    %v737 = vand.u32 %v31, 4294901760
    %738 = vmatpush1.msra.mxu0 %v737
    %739 = vmatprep.subr.mxu0 0.0
    %740 = vmatpush1.msra.mxu0 0.0
    %741 = vmatprep.subr.mxu0 0.0
    %742 = vmatpush1.msra.mxu0 0.0
    %743 = vmatprep.subr.mxu0 0.0
    %744 = vmatpush1.msra.mxu0 0.0
    %745 = vmatprep.subr.mxu0 0.0
    %746 = vmatpush1.msra.mxu0 0.0
    %747 = vmatprep.subr.mxu0 0.0
    %748 = vmatpush1.msra.mxu0 0.0
    %749 = vmatprep.subr.mxu0 0.0
    %750 = vmatpush1.msra.mxu0 0.0
    %751 = vmatprep.subr.mxu0 0.0
    %752 = vmatpush1.msra.mxu0 0.0
    %753 = vmatprep.subr.mxu0 0.0
    %754 = vmatpush1.msra.mxu0 0.0
    %755 = vmatprep.subr.mxu0 0.0
    %756 = vmatpush1.msra.mxu0 0.0
    %757 = vmatprep.subr.mxu0 0.0
    %758 = vmatpush1.msra.mxu0 0.0
    %759 = vmatprep.subr.mxu0 0.0
    %760 = vmatpush1.msra.mxu0 0.0
    %761 = vmatprep.subr.mxu0 0.0
    %762 = vmatpush1.msra.mxu0 0.0
    %763 = vmatprep.subr.mxu0 0.0
    %764 = vmatpush1.msra.mxu0 0.0
    %765 = vmatprep.subr.mxu0 0.0
    %766 = vmatpush1.msra.mxu0 0.0
    %767 = vmatprep.subr.mxu0 0.0
    %768 = vmatpush1.msra.mxu0 0.0
    %769 = vmatprep.subr.mxu0 0.0
    %770 = vmatpush1.msra.mxu0 0.0
    %771 = vmatprep.mubr.f32.mxu0 0.0
    %v772 = vand.u32 %v15, 4294901760
    %v773 = vsub.f32 %v15, %v772
    %v774 = vand.u32 %v773, 4294901760
    %v775 = vsub.f32 %v773, %v774
    %v776 = vand.u32 %v775, 4294901760
    %777 = vmatmul.mubr.f32.gmra.mrb[0].mxu0 %v776
    %v778 = vpop.f32.mrb[0].mxu0
    %v779 = vadd.f32 %v688, %v778
    %v780 = vpop.f32.mrb[0].mxu0
    %781 = vdwg.mxu0
    %782 = vmatprep.subr.mxu0 0.0
    %v783 = vand.u32 %v16, 4294901760
    %v784 = vsub.f32 %v16, %v783
    %v785 = vand.u32 %v784, 4294901760
    %v786 = vsub.f32 %v784, %v785
    %v787 = vand.u32 %v786, 4294901760
    %788 = vmatpush1.msra.mxu0 %v787
    %789 = vmatprep.subr.mxu0 0.0
    %v790 = vand.u32 %v17, 4294901760
    %v791 = vsub.f32 %v17, %v790
    %v792 = vand.u32 %v791, 4294901760
    %v793 = vsub.f32 %v791, %v792
    %v794 = vand.u32 %v793, 4294901760
    %795 = vmatpush1.msra.mxu0 %v794
    %796 = vmatprep.subr.mxu0 0.0
    %v797 = vand.u32 %v18, 4294901760
    %v798 = vsub.f32 %v18, %v797
    %v799 = vand.u32 %v798, 4294901760
    %v800 = vsub.f32 %v798, %v799
    %v801 = vand.u32 %v800, 4294901760
    %802 = vmatpush1.msra.mxu0 %v801
    %803 = vmatprep.subr.mxu0 0.0
    %v804 = vand.u32 %v19, 4294901760
    %v805 = vsub.f32 %v19, %v804
    %v806 = vand.u32 %v805, 4294901760
    %v807 = vsub.f32 %v805, %v806
    %v808 = vand.u32 %v807, 4294901760
    %809 = vmatpush1.msra.mxu0 %v808
    %810 = vmatprep.subr.mxu0 0.0
    %v811 = vand.u32 %v20, 4294901760
    %v812 = vsub.f32 %v20, %v811
    %v813 = vand.u32 %v812, 4294901760
    %v814 = vsub.f32 %v812, %v813
    %v815 = vand.u32 %v814, 4294901760
    %816 = vmatpush1.msra.mxu0 %v815
    %817 = vmatprep.subr.mxu0 0.0
    %v818 = vand.u32 %v21, 4294901760
    %v819 = vsub.f32 %v21, %v818
    %v820 = vand.u32 %v819, 4294901760
    %v821 = vsub.f32 %v819, %v820
    %v822 = vand.u32 %v821, 4294901760
    %823 = vmatpush1.msra.mxu0 %v822
    %824 = vmatprep.subr.mxu0 0.0
    %v825 = vand.u32 %v22, 4294901760
    %v826 = vsub.f32 %v22, %v825
    %v827 = vand.u32 %v826, 4294901760
    %v828 = vsub.f32 %v826, %v827
    %v829 = vand.u32 %v828, 4294901760
    %830 = vmatpush1.msra.mxu0 %v829
    %831 = vmatprep.subr.mxu0 0.0
    %v832 = vand.u32 %v23, 4294901760
    %v833 = vsub.f32 %v23, %v832
    %v834 = vand.u32 %v833, 4294901760
    %v835 = vsub.f32 %v833, %v834
    %v836 = vand.u32 %v835, 4294901760
    %837 = vmatpush1.msra.mxu0 %v836
    %838 = vmatprep.subr.mxu0 0.0
    %v839 = vand.u32 %v24, 4294901760
    %v840 = vsub.f32 %v24, %v839
    %v841 = vand.u32 %v840, 4294901760
    %v842 = vsub.f32 %v840, %v841
    %v843 = vand.u32 %v842, 4294901760
    %844 = vmatpush1.msra.mxu0 %v843
    %845 = vmatprep.subr.mxu0 0.0
    %v846 = vand.u32 %v25, 4294901760
    %v847 = vsub.f32 %v25, %v846
    %v848 = vand.u32 %v847, 4294901760
    %v849 = vsub.f32 %v847, %v848
    %v850 = vand.u32 %v849, 4294901760
    %851 = vmatpush1.msra.mxu0 %v850
    %852 = vmatprep.subr.mxu0 0.0
    %v853 = vand.u32 %v26, 4294901760
    %v854 = vsub.f32 %v26, %v853
    %v855 = vand.u32 %v854, 4294901760
    %v856 = vsub.f32 %v854, %v855
    %v857 = vand.u32 %v856, 4294901760
    %858 = vmatpush1.msra.mxu0 %v857
    %859 = vmatprep.subr.mxu0 0.0
    %v860 = vand.u32 %v27, 4294901760
    %v861 = vsub.f32 %v27, %v860
    %v862 = vand.u32 %v861, 4294901760
    %v863 = vsub.f32 %v861, %v862
    %v864 = vand.u32 %v863, 4294901760
    %865 = vmatpush1.msra.mxu0 %v864
    %866 = vmatprep.subr.mxu0 0.0
    %v867 = vand.u32 %v28, 4294901760
    %v868 = vsub.f32 %v28, %v867
    %v869 = vand.u32 %v868, 4294901760
    %v870 = vsub.f32 %v868, %v869
    %v871 = vand.u32 %v870, 4294901760
    %872 = vmatpush1.msra.mxu0 %v871
    %873 = vmatprep.subr.mxu0 0.0
    %v874 = vand.u32 %v29, 4294901760
    %v875 = vsub.f32 %v29, %v874
    %v876 = vand.u32 %v875, 4294901760
    %v877 = vsub.f32 %v875, %v876
    %v878 = vand.u32 %v877, 4294901760
    %879 = vmatpush1.msra.mxu0 %v878
    %880 = vmatprep.subr.mxu0 0.0
    %v881 = vand.u32 %v30, 4294901760
    %v882 = vsub.f32 %v30, %v881
    %v883 = vand.u32 %v882, 4294901760
    %v884 = vsub.f32 %v882, %v883
    %v885 = vand.u32 %v884, 4294901760
    %886 = vmatpush1.msra.mxu0 %v885
    %887 = vmatprep.subr.mxu0 0.0
    %v888 = vand.u32 %v31, 4294901760
    %v889 = vsub.f32 %v31, %v888
    %v890 = vand.u32 %v889, 4294901760
    %v891 = vsub.f32 %v889, %v890
    %v892 = vand.u32 %v891, 4294901760
    %893 = vmatpush1.msra.mxu0 %v892
    %894 = vmatprep.subr.mxu0 0.0
    %895 = vmatpush1.msra.mxu0 0.0
    %896 = vmatprep.subr.mxu0 0.0
    %897 = vmatpush1.msra.mxu0 0.0
    %898 = vmatprep.subr.mxu0 0.0
    %899 = vmatpush1.msra.mxu0 0.0
    %900 = vmatprep.subr.mxu0 0.0
    %901 = vmatpush1.msra.mxu0 0.0
    %902 = vmatprep.subr.mxu0 0.0
    %903 = vmatpush1.msra.mxu0 0.0
    %904 = vmatprep.subr.mxu0 0.0
    %905 = vmatpush1.msra.mxu0 0.0
    %906 = vmatprep.subr.mxu0 0.0
    %907 = vmatpush1.msra.mxu0 0.0
    %908 = vmatprep.subr.mxu0 0.0
    %909 = vmatpush1.msra.mxu0 0.0
    %910 = vmatprep.subr.mxu0 0.0
    %911 = vmatpush1.msra.mxu0 0.0
    %912 = vmatprep.subr.mxu0 0.0
    %913 = vmatpush1.msra.mxu0 0.0
    %914 = vmatprep.subr.mxu0 0.0
    %915 = vmatpush1.msra.mxu0 0.0
    %916 = vmatprep.subr.mxu0 0.0
    %917 = vmatpush1.msra.mxu0 0.0
    %918 = vmatprep.subr.mxu0 0.0
    %919 = vmatpush1.msra.mxu0 0.0
    %920 = vmatprep.subr.mxu0 0.0
    %921 = vmatpush1.msra.mxu0 0.0
    %922 = vmatprep.subr.mxu0 0.0
    %923 = vmatpush1.msra.mxu0 0.0
    %924 = vmatprep.subr.mxu0 0.0
    %925 = vmatpush1.msra.mxu0 0.0
    %926 = vmatprep.mubr.f32.mxu0 0.0
    %v927 = vand.u32 %v15, 4294901760
    %928 = vmatmul.mubr.f32.gmra.mrb[0].mxu0 %v927
    %v929 = vpop.f32.mrb[0].mxu0
    %v930 = vadd.f32 %v779, %v929
    %v931 = vpop.f32.mrb[0].mxu0
    %932 = vdwg.mxu0
    %933 = vmatprep.subr.mxu0 0.0
    %v934 = vand.u32 %v16, 4294901760
    %v935 = vsub.f32 %v16, %v934
    %936 = vmatpush1.msra.mxu0 %v935
    %937 = vmatprep.subr.mxu0 0.0
    %v938 = vand.u32 %v17, 4294901760
    %v939 = vsub.f32 %v17, %v938
    %940 = vmatpush1.msra.mxu0 %v939
    %941 = vmatprep.subr.mxu0 0.0
    %v942 = vand.u32 %v18, 4294901760
    %v943 = vsub.f32 %v18, %v942
    %944 = vmatpush1.msra.mxu0 %v943
    %945 = vmatprep.subr.mxu0 0.0
    %v946 = vand.u32 %v19, 4294901760
    %v947 = vsub.f32 %v19, %v946
    %948 = vmatpush1.msra.mxu0 %v947
    %949 = vmatprep.subr.mxu0 0.0
    %v950 = vand.u32 %v20, 4294901760
    %v951 = vsub.f32 %v20, %v950
    %952 = vmatpush1.msra.mxu0 %v951
    %953 = vmatprep.subr.mxu0 0.0
    %v954 = vand.u32 %v21, 4294901760
    %v955 = vsub.f32 %v21, %v954
    %956 = vmatpush1.msra.mxu0 %v955
    %957 = vmatprep.subr.mxu0 0.0
    %v958 = vand.u32 %v22, 4294901760
    %v959 = vsub.f32 %v22, %v958
    %960 = vmatpush1.msra.mxu0 %v959
    %961 = vmatprep.subr.mxu0 0.0
    %v962 = vand.u32 %v23, 4294901760
    %v963 = vsub.f32 %v23, %v962
    %964 = vmatpush1.msra.mxu0 %v963
    %965 = vmatprep.subr.mxu0 0.0
    %v966 = vand.u32 %v24, 4294901760
    %v967 = vsub.f32 %v24, %v966
    %968 = vmatpush1.msra.mxu0 %v967
    %969 = vmatprep.subr.mxu0 0.0
    %v970 = vand.u32 %v25, 4294901760
    %v971 = vsub.f32 %v25, %v970
    %972 = vmatpush1.msra.mxu0 %v971
    %973 = vmatprep.subr.mxu0 0.0
    %v974 = vand.u32 %v26, 4294901760
    %v975 = vsub.f32 %v26, %v974
    %976 = vmatpush1.msra.mxu0 %v975
    %977 = vmatprep.subr.mxu0 0.0
    %v978 = vand.u32 %v27, 4294901760
    %v979 = vsub.f32 %v27, %v978
    %980 = vmatpush1.msra.mxu0 %v979
    %981 = vmatprep.subr.mxu0 0.0
    %v982 = vand.u32 %v28, 4294901760
    %v983 = vsub.f32 %v28, %v982
    %984 = vmatpush1.msra.mxu0 %v983
    %985 = vmatprep.subr.mxu0 0.0
    %v986 = vand.u32 %v29, 4294901760
    %v987 = vsub.f32 %v29, %v986
    %988 = vmatpush1.msra.mxu0 %v987
    %989 = vmatprep.subr.mxu0 0.0
    %v990 = vand.u32 %v30, 4294901760
    %v991 = vsub.f32 %v30, %v990
    %992 = vmatpush1.msra.mxu0 %v991
    %993 = vmatprep.subr.mxu0 0.0
    %v994 = vand.u32 %v31, 4294901760
    %v995 = vsub.f32 %v31, %v994
    %996 = vmatpush1.msra.mxu0 %v995
    %997 = vmatprep.subr.mxu0 0.0
    %998 = vmatpush1.msra.mxu0 0.0
    %999 = vmatprep.subr.mxu0 0.0
    %1000 = vmatpush1.msra.mxu0 0.0
    %1001 = vmatprep.subr.mxu0 0.0
    %1002 = vmatpush1.msra.mxu0 0.0
    %1003 = vmatprep.subr.mxu0 0.0
    %1004 = vmatpush1.msra.mxu0 0.0
    %1005 = vmatprep.subr.mxu0 0.0
    %1006 = vmatpush1.msra.mxu0 0.0
    %1007 = vmatprep.subr.mxu0 0.0
    %1008 = vmatpush1.msra.mxu0 0.0
    %1009 = vmatprep.subr.mxu0 0.0
    %1010 = vmatpush1.msra.mxu0 0.0
    %1011 = vmatprep.subr.mxu0 0.0
    %1012 = vmatpush1.msra.mxu0 0.0
    %1013 = vmatprep.subr.mxu0 0.0
    %1014 = vmatpush1.msra.mxu0 0.0
    %1015 = vmatprep.subr.mxu0 0.0
    %1016 = vmatpush1.msra.mxu0 0.0
    %1017 = vmatprep.subr.mxu0 0.0
    %1018 = vmatpush1.msra.mxu0 0.0
    %1019 = vmatprep.subr.mxu0 0.0
    %1020 = vmatpush1.msra.mxu0 0.0
    %1021 = vmatprep.subr.mxu0 0.0
    %1022 = vmatpush1.msra.mxu0 0.0
    %1023 = vmatprep.subr.mxu0 0.0
    %1024 = vmatpush1.msra.mxu0 0.0
    %1025 = vmatprep.subr.mxu0 0.0
    %1026 = vmatpush1.msra.mxu0 0.0
    %1027 = vmatprep.subr.mxu0 0.0
    %1028 = vmatpush1.msra.mxu0 0.0
    %1029 = vmatprep.mubr.f32.mxu0 0.0
    %v1030 = vand.u32 %v15, 4294901760
    %v1031 = vsub.f32 %v15, %v1030
    %1032 = vmatmul.mubr.f32.gmra.mrb[0].mxu0 %v1031
    %v1033 = vpop.f32.mrb[0].mxu0
    %v1034 = vadd.f32 %v930, %v1033
    %v1035 = vpop.f32.mrb[0].mxu0
    %1036 = vdwg.mxu0
    %1037 = vmatprep.subr.mxu0 0.0
    %v1038 = vand.u32 %v16, 4294901760
    %1039 = vmatpush1.msra.mxu0 %v1038
    %1040 = vmatprep.subr.mxu0 0.0
    %v1041 = vand.u32 %v17, 4294901760
    %1042 = vmatpush1.msra.mxu0 %v1041
    %1043 = vmatprep.subr.mxu0 0.0
    %v1044 = vand.u32 %v18, 4294901760
    %1045 = vmatpush1.msra.mxu0 %v1044
    %1046 = vmatprep.subr.mxu0 0.0
    %v1047 = vand.u32 %v19, 4294901760
    %1048 = vmatpush1.msra.mxu0 %v1047
    %1049 = vmatprep.subr.mxu0 0.0
    %v1050 = vand.u32 %v20, 4294901760
    %1051 = vmatpush1.msra.mxu0 %v1050
    %1052 = vmatprep.subr.mxu0 0.0
    %v1053 = vand.u32 %v21, 4294901760
    %1054 = vmatpush1.msra.mxu0 %v1053
    %1055 = vmatprep.subr.mxu0 0.0
    %v1056 = vand.u32 %v22, 4294901760
    %1057 = vmatpush1.msra.mxu0 %v1056
    %1058 = vmatprep.subr.mxu0 0.0
    %v1059 = vand.u32 %v23, 4294901760
    %1060 = vmatpush1.msra.mxu0 %v1059
    %1061 = vmatprep.subr.mxu0 0.0
    %v1062 = vand.u32 %v24, 4294901760
    %1063 = vmatpush1.msra.mxu0 %v1062
    %1064 = vmatprep.subr.mxu0 0.0
    %v1065 = vand.u32 %v25, 4294901760
    %1066 = vmatpush1.msra.mxu0 %v1065
    %1067 = vmatprep.subr.mxu0 0.0
    %v1068 = vand.u32 %v26, 4294901760
    %1069 = vmatpush1.msra.mxu0 %v1068
    %1070 = vmatprep.subr.mxu0 0.0
    %v1071 = vand.u32 %v27, 4294901760
    %1072 = vmatpush1.msra.mxu0 %v1071
    %1073 = vmatprep.subr.mxu0 0.0
    %v1074 = vand.u32 %v28, 4294901760
    %1075 = vmatpush1.msra.mxu0 %v1074
    %1076 = vmatprep.subr.mxu0 0.0
    %v1077 = vand.u32 %v29, 4294901760
    %1078 = vmatpush1.msra.mxu0 %v1077
    %1079 = vmatprep.subr.mxu0 0.0
    %v1080 = vand.u32 %v30, 4294901760
    %1081 = vmatpush1.msra.mxu0 %v1080
    %1082 = vmatprep.subr.mxu0 0.0
    %v1083 = vand.u32 %v31, 4294901760
    %1084 = vmatpush1.msra.mxu0 %v1083
    %1085 = vmatprep.subr.mxu0 0.0
    %1086 = vmatpush1.msra.mxu0 0.0
    %1087 = vmatprep.subr.mxu0 0.0
    %1088 = vmatpush1.msra.mxu0 0.0
    %1089 = vmatprep.subr.mxu0 0.0
    %1090 = vmatpush1.msra.mxu0 0.0
    %1091 = vmatprep.subr.mxu0 0.0
    %1092 = vmatpush1.msra.mxu0 0.0
    %1093 = vmatprep.subr.mxu0 0.0
    %1094 = vmatpush1.msra.mxu0 0.0
    %1095 = vmatprep.subr.mxu0 0.0
    %1096 = vmatpush1.msra.mxu0 0.0
    %1097 = vmatprep.subr.mxu0 0.0
    %1098 = vmatpush1.msra.mxu0 0.0
    %1099 = vmatprep.subr.mxu0 0.0
    %1100 = vmatpush1.msra.mxu0 0.0
    %1101 = vmatprep.subr.mxu0 0.0
    %1102 = vmatpush1.msra.mxu0 0.0
    %1103 = vmatprep.subr.mxu0 0.0
    %1104 = vmatpush1.msra.mxu0 0.0
    %1105 = vmatprep.subr.mxu0 0.0
    %1106 = vmatpush1.msra.mxu0 0.0
    %1107 = vmatprep.subr.mxu0 0.0
    %1108 = vmatpush1.msra.mxu0 0.0
    %1109 = vmatprep.subr.mxu0 0.0
    %1110 = vmatpush1.msra.mxu0 0.0
    %1111 = vmatprep.subr.mxu0 0.0
    %1112 = vmatpush1.msra.mxu0 0.0
    %1113 = vmatprep.subr.mxu0 0.0
    %1114 = vmatpush1.msra.mxu0 0.0
    %1115 = vmatprep.subr.mxu0 0.0
    %1116 = vmatpush1.msra.mxu0 0.0
    %1117 = vmatprep.mubr.f32.mxu0 0.0
    %v1118 = vand.u32 %v15, 4294901760
    %v1119 = vsub.f32 %v15, %v1118
    %v1120 = vand.u32 %v1119, 4294901760
    %1121 = vmatmul.mubr.f32.gmra.mrb[0].mxu0 %v1120
    %v1122 = vpop.f32.mrb[0].mxu0
    %v1123 = vadd.f32 %v1034, %v1122
    %v1124 = vpop.f32.mrb[0].mxu0
    %1125 = vdwg.mxu0
    %1126 = vmatprep.subr.mxu0 0.0
    %v1127 = vand.u32 %v16, 4294901760
    %v1128 = vsub.f32 %v16, %v1127
    %v1129 = vand.u32 %v1128, 4294901760
    %1130 = vmatpush1.msra.mxu0 %v1129
    %1131 = vmatprep.subr.mxu0 0.0
    %v1132 = vand.u32 %v17, 4294901760
    %v1133 = vsub.f32 %v17, %v1132
    %v1134 = vand.u32 %v1133, 4294901760
    %1135 = vmatpush1.msra.mxu0 %v1134
    %1136 = vmatprep.subr.mxu0 0.0
    %v1137 = vand.u32 %v18, 4294901760
    %v1138 = vsub.f32 %v18, %v1137
    %v1139 = vand.u32 %v1138, 4294901760
    %1140 = vmatpush1.msra.mxu0 %v1139
    %1141 = vmatprep.subr.mxu0 0.0
    %v1142 = vand.u32 %v19, 4294901760
    %v1143 = vsub.f32 %v19, %v1142
    %v1144 = vand.u32 %v1143, 4294901760
    %1145 = vmatpush1.msra.mxu0 %v1144
    %1146 = vmatprep.subr.mxu0 0.0
    %v1147 = vand.u32 %v20, 4294901760
    %v1148 = vsub.f32 %v20, %v1147
    %v1149 = vand.u32 %v1148, 4294901760
    %1150 = vmatpush1.msra.mxu0 %v1149
    %1151 = vmatprep.subr.mxu0 0.0
    %v1152 = vand.u32 %v21, 4294901760
    %v1153 = vsub.f32 %v21, %v1152
    %v1154 = vand.u32 %v1153, 4294901760
    %1155 = vmatpush1.msra.mxu0 %v1154
    %1156 = vmatprep.subr.mxu0 0.0
    %v1157 = vand.u32 %v22, 4294901760
    %v1158 = vsub.f32 %v22, %v1157
    %v1159 = vand.u32 %v1158, 4294901760
    %1160 = vmatpush1.msra.mxu0 %v1159
    %1161 = vmatprep.subr.mxu0 0.0
    %v1162 = vand.u32 %v23, 4294901760
    %v1163 = vsub.f32 %v23, %v1162
    %v1164 = vand.u32 %v1163, 4294901760
    %1165 = vmatpush1.msra.mxu0 %v1164
    %1166 = vmatprep.subr.mxu0 0.0
    %v1167 = vand.u32 %v24, 4294901760
    %v1168 = vsub.f32 %v24, %v1167
    %v1169 = vand.u32 %v1168, 4294901760
    %1170 = vmatpush1.msra.mxu0 %v1169
    %1171 = vmatprep.subr.mxu0 0.0
    %v1172 = vand.u32 %v25, 4294901760
    %v1173 = vsub.f32 %v25, %v1172
    %v1174 = vand.u32 %v1173, 4294901760
    %1175 = vmatpush1.msra.mxu0 %v1174
    %1176 = vmatprep.subr.mxu0 0.0
    %v1177 = vand.u32 %v26, 4294901760
    %v1178 = vsub.f32 %v26, %v1177
    %v1179 = vand.u32 %v1178, 4294901760
    %1180 = vmatpush1.msra.mxu0 %v1179
    %1181 = vmatprep.subr.mxu0 0.0
    %v1182 = vand.u32 %v27, 4294901760
    %v1183 = vsub.f32 %v27, %v1182
    %v1184 = vand.u32 %v1183, 4294901760
    %1185 = vmatpush1.msra.mxu0 %v1184
    %1186 = vmatprep.subr.mxu0 0.0
    %v1187 = vand.u32 %v28, 4294901760
    %v1188 = vsub.f32 %v28, %v1187
    %v1189 = vand.u32 %v1188, 4294901760
    %1190 = vmatpush1.msra.mxu0 %v1189
    %1191 = vmatprep.subr.mxu0 0.0
    %v1192 = vand.u32 %v29, 4294901760
    %v1193 = vsub.f32 %v29, %v1192
    %v1194 = vand.u32 %v1193, 4294901760
    %1195 = vmatpush1.msra.mxu0 %v1194
    %1196 = vmatprep.subr.mxu0 0.0
    %v1197 = vand.u32 %v30, 4294901760
    %v1198 = vsub.f32 %v30, %v1197
    %v1199 = vand.u32 %v1198, 4294901760
    %1200 = vmatpush1.msra.mxu0 %v1199
    %1201 = vmatprep.subr.mxu0 0.0
    %v1202 = vand.u32 %v31, 4294901760
    %v1203 = vsub.f32 %v31, %v1202
    %v1204 = vand.u32 %v1203, 4294901760
    %1205 = vmatpush1.msra.mxu0 %v1204
    %1206 = vmatprep.subr.mxu0 0.0
    %1207 = vmatpush1.msra.mxu0 0.0
    %1208 = vmatprep.subr.mxu0 0.0
    %1209 = vmatpush1.msra.mxu0 0.0
    %1210 = vmatprep.subr.mxu0 0.0
    %1211 = vmatpush1.msra.mxu0 0.0
    %1212 = vmatprep.subr.mxu0 0.0
    %1213 = vmatpush1.msra.mxu0 0.0
    %1214 = vmatprep.subr.mxu0 0.0
    %1215 = vmatpush1.msra.mxu0 0.0
    %1216 = vmatprep.subr.mxu0 0.0
    %1217 = vmatpush1.msra.mxu0 0.0
    %1218 = vmatprep.subr.mxu0 0.0
    %1219 = vmatpush1.msra.mxu0 0.0
    %1220 = vmatprep.subr.mxu0 0.0
    %1221 = vmatpush1.msra.mxu0 0.0
    %1222 = vmatprep.subr.mxu0 0.0
    %1223 = vmatpush1.msra.mxu0 0.0
    %1224 = vmatprep.subr.mxu0 0.0
    %1225 = vmatpush1.msra.mxu0 0.0
    %1226 = vmatprep.subr.mxu0 0.0
    %1227 = vmatpush1.msra.mxu0 0.0
    %1228 = vmatprep.subr.mxu0 0.0
    %1229 = vmatpush1.msra.mxu0 0.0
    %1230 = vmatprep.subr.mxu0 0.0
    %1231 = vmatpush1.msra.mxu0 0.0
    %1232 = vmatprep.subr.mxu0 0.0
    %1233 = vmatpush1.msra.mxu0 0.0
    %1234 = vmatprep.subr.mxu0 0.0
    %1235 = vmatpush1.msra.mxu0 0.0
    %1236 = vmatprep.subr.mxu0 0.0
    %1237 = vmatpush1.msra.mxu0 0.0
    %1238 = vmatprep.mubr.f32.mxu0 0.0
    %v1239 = vand.u32 %v15, 4294901760
    %1240 = vmatmul.mubr.f32.gmra.mrb[0].mxu0 %v1239
    %v1241 = vpop.f32.mrb[0].mxu0
    %v1242 = vadd.f32 %v1123, %v1241
    %v1243 = vpop.f32.mrb[0].mxu0
    %1244 = vdwg.mxu0
    %1245 = vmatprep.subr.mxu0 0.0
    %v1246 = vand.u32 %v16, 4294901760
    %1247 = vmatpush1.msra.mxu0 %v1246
    %1248 = vmatprep.subr.mxu0 0.0
    %v1249 = vand.u32 %v17, 4294901760
    %1250 = vmatpush1.msra.mxu0 %v1249
    %1251 = vmatprep.subr.mxu0 0.0
    %v1252 = vand.u32 %v18, 4294901760
    %1253 = vmatpush1.msra.mxu0 %v1252
    %1254 = vmatprep.subr.mxu0 0.0
    %v1255 = vand.u32 %v19, 4294901760
    %1256 = vmatpush1.msra.mxu0 %v1255
    %1257 = vmatprep.subr.mxu0 0.0
    %v1258 = vand.u32 %v20, 4294901760
    %1259 = vmatpush1.msra.mxu0 %v1258
    %1260 = vmatprep.subr.mxu0 0.0
    %v1261 = vand.u32 %v21, 4294901760
    %1262 = vmatpush1.msra.mxu0 %v1261
    %1263 = vmatprep.subr.mxu0 0.0
    %v1264 = vand.u32 %v22, 4294901760
    %1265 = vmatpush1.msra.mxu0 %v1264
    %1266 = vmatprep.subr.mxu0 0.0
    %v1267 = vand.u32 %v23, 4294901760
    %1268 = vmatpush1.msra.mxu0 %v1267
    %1269 = vmatprep.subr.mxu0 0.0
    %v1270 = vand.u32 %v24, 4294901760
    %1271 = vmatpush1.msra.mxu0 %v1270
    %1272 = vmatprep.subr.mxu0 0.0
    %v1273 = vand.u32 %v25, 4294901760
    %1274 = vmatpush1.msra.mxu0 %v1273
    %1275 = vmatprep.subr.mxu0 0.0
    %v1276 = vand.u32 %v26, 4294901760
    %1277 = vmatpush1.msra.mxu0 %v1276
    %1278 = vmatprep.subr.mxu0 0.0
    %v1279 = vand.u32 %v27, 4294901760
    %1280 = vmatpush1.msra.mxu0 %v1279
    %1281 = vmatprep.subr.mxu0 0.0
    %v1282 = vand.u32 %v28, 4294901760
    %1283 = vmatpush1.msra.mxu0 %v1282
    %1284 = vmatprep.subr.mxu0 0.0
    %v1285 = vand.u32 %v29, 4294901760
    %1286 = vmatpush1.msra.mxu0 %v1285
    %1287 = vmatprep.subr.mxu0 0.0
    %v1288 = vand.u32 %v30, 4294901760
    %1289 = vmatpush1.msra.mxu0 %v1288
    %1290 = vmatprep.subr.mxu0 0.0
    %v1291 = vand.u32 %v31, 4294901760
    %1292 = vmatpush1.msra.mxu0 %v1291
    %1293 = vmatprep.subr.mxu0 0.0
    %1294 = vmatpush1.msra.mxu0 0.0
    %1295 = vmatprep.subr.mxu0 0.0
    %1296 = vmatpush1.msra.mxu0 0.0
    %1297 = vmatprep.subr.mxu0 0.0
    %1298 = vmatpush1.msra.mxu0 0.0
    %1299 = vmatprep.subr.mxu0 0.0
    %1300 = vmatpush1.msra.mxu0 0.0
    %1301 = vmatprep.subr.mxu0 0.0
    %1302 = vmatpush1.msra.mxu0 0.0
    %1303 = vmatprep.subr.mxu0 0.0
    %1304 = vmatpush1.msra.mxu0 0.0
    %1305 = vmatprep.subr.mxu0 0.0
    %1306 = vmatpush1.msra.mxu0 0.0
    %1307 = vmatprep.subr.mxu0 0.0
    %1308 = vmatpush1.msra.mxu0 0.0
    %1309 = vmatprep.subr.mxu0 0.0
    %1310 = vmatpush1.msra.mxu0 0.0
    %1311 = vmatprep.subr.mxu0 0.0
    %1312 = vmatpush1.msra.mxu0 0.0
    %1313 = vmatprep.subr.mxu0 0.0
    %1314 = vmatpush1.msra.mxu0 0.0
    %1315 = vmatprep.subr.mxu0 0.0
    %1316 = vmatpush1.msra.mxu0 0.0
    %1317 = vmatprep.subr.mxu0 0.0
    %1318 = vmatpush1.msra.mxu0 0.0
    %1319 = vmatprep.subr.mxu0 0.0
    %1320 = vmatpush1.msra.mxu0 0.0
    %1321 = vmatprep.subr.mxu0 0.0
    %1322 = vmatpush1.msra.mxu0 0.0
    %1323 = vmatprep.subr.mxu0 0.0
    %1324 = vmatpush1.msra.mxu0 0.0
    %1325 = vmatprep.mubr.f32.mxu0 0.0
    %v1326 = vand.u32 %v15, 4294901760
    %1327 = vmatmul.mubr.f32.gmra.mrb[0].mxu0 %v1326
    %v1328 = vpop.f32.mrb[0].mxu0
    %v1329 = vadd.f32 %v1242, %v1328
    %v1330 = vpop.f32.mrb[0].mxu0
    %1331 = vdwg.mxu0
    %v1332 = vld [vmem:[%s2] sm:$0x1]
    %v1334 = vlaneseq
    %v1335 = vshrl.u32 %v1334, 7
    %v1336 = vsub.s32 0, %v1335
    %v1337 = vrot.slane %v1332, %v1336
    %v1339 = vadd.f32 %v1329, %v1337
    %vm1340 = vcmask 195584
    %1341 = vst.msk [vmem:[#allocation2] sm:$0xff] %vm1340, %v1339
    // Predicated region
    $region14: #{tpu_custom_call.1} parent=1 // pred_check
      _
    $region15: #{tpu_custom_call.1} parent=1 // pred_check_branch
      %1343 = sbr.rel (0) target = $region17
    $region16: #{tpu_custom_call.1} parent=1 // pred_region
      %s1345 = ssub.s32 128, 128
      %1346 = vsyncadd [#allocation3], %s1345
      %s1348 = sshll.u32 [#allocation2], 4
      %s1349 = int_to_ptr.vmem [resolvable:$true] %s1348
      %1351 = dma.vmem_to_hbm [thread:$0]  %s1349, 128, %s3, [#allocation3]
    $region17: #{tpu_custom_call.1} parent=1 // pred_fallthru
      _
    // Predicated region
    $region18: #{tpu_custom_call.1} parent=1 // pred_check
      _
    $region19: #{tpu_custom_call.1} parent=1 // pred_check_branch
      %1353 = sbr.rel (0) target = $region21
    $region20: #{tpu_custom_call.1} parent=1 // pred_region
      %1354 = dma.done [#allocation3], 128
    $region21: #{tpu_custom_call.1} parent=1 // pred_fallthru
      _
    %1355 = vsyncpa [#allocation3], 1

</llo_original>
